<compile_context>
chip_gen: v6e
topology: v6e:2x2x1
jax: 0.10.0
libtpu: 0.0.40
codegen_flags: <defaults>
</compile_context>

<pallas_src>
import functools

import jax
import jax.numpy as jnp
from jax.experimental import pallas as pl
from jax.experimental.pallas import tpu as pltpu

EMBEDDING_SIZE = 128


def _round_up(x, m):
    return ((x + m - 1) // m) * m


def _k_tiling(K):
    """Returns (TK, K_pad, num_k)."""
    if K <= 1024:
        # Single whole-K tile: block dim equals the full array dim, so no
        # (8,128) divisibility requirement and no padding at all.
        return K, K, 1
    TK = 512
    K_pad = _round_up(K, TK)
    return TK, K_pad, K_pad // TK


def _m_tiling(M, TK):
    """Row-tile size: multiple of 8, bounded by a VMEM budget, >=2 tiles."""
    M8 = _round_up(M, 8)
    # Keep the double-buffered f32 x tile around <= 8 MiB.
    cap = (8 << 20) // (2 * 4 * max(TK, 1))
    cap = max(8, min(1024, (cap // 8) * 8))
    tm = min(cap, M8)
    # Prefer >= 2 row tiles so the "parallel" M axis can shard across the two
    # TensorCores on v7x even for small batches.
    if tm == M8 and M8 > 8:
        tm = _round_up((M8 + 1) // 2, 8)
    return tm


def _linear_kernel(x_ref, w_ref, b_ref, o_ref, *, K, TK, num_k):
    # x_ref: (TM, TK) f32 streamed tile
    # w_ref: (K_pad, 128) bf16, fully VMEM-resident (constant block index)
    # b_ref: (1, 128) f32, resident
    # o_ref: (TM, 128) f32, resident across the K axis (acts as accumulator)
    k = pl.program_id(1)

    @pl.when(k == 0)
    def _():
        o_ref[...] = jnp.broadcast_to(b_ref[...], o_ref.shape)

    x = x_ref[...]
    if num_k > 1 and (K % TK) != 0:
        # Ragged last K tile: out-of-range lanes are garbage, zero them.
        col = k * TK + jax.lax.broadcasted_iota(jnp.int32, x.shape, 1)
        x = jnp.where(col < K, x, 0.0)
    x = x.astype(jnp.bfloat16)  # in-kernel cast (VPU, free under the DMA)

    if num_k == 1:
        w = w_ref[...]
    else:
        start = pl.multiple_of(k * TK, TK)
        w = w_ref[pl.ds(start, TK), :]

    o_ref[...] += jnp.dot(x, w, preferred_element_type=jnp.float32)


def prepare_params(weight, bias):
    """One-time parameter prep (at load time, NOT per forward call).

    weight: (128, K) f32   (PyTorch nn.Linear convention)
    bias:   (128,)   f32
    returns w_kn (K_pad, 128) bf16 (transposed, zero-padded rows past K),
            b2d  (1, 128) f32
    """
    N, K = weight.shape
    assert N == EMBEDDING_SIZE
    _, K_pad, _ = _k_tiling(K)
    w_kn = weight.T                      # (K, 128): lane-dense output dim
    if K_pad != K:
        w_kn = jnp.pad(w_kn, ((0, K_pad - K), (0, 0)))
    return w_kn.astype(jnp.bfloat16), bias.reshape(1, N).astype(jnp.float32)


def image_encoder_forward(obs, w_kn, b2d):
    """Pallas equivalent of ImageEncoder.forward (tensor path).

    obs:  (B, T, H, W, C) float32
    w_kn: (K_pad, 128) bfloat16   (from prepare_params)
    b2d:  (1, 128) float32
    returns (B, T, 128) float32
    """
    B, T = int(obs.shape[0]), int(obs.shape[1])
    K = int(obs.shape[2]) * int(obs.shape[3]) * int(obs.shape[4])
    M = B * T
    N = EMBEDDING_SIZE

    TK, K_pad, num_k = _k_tiling(K)
    TM = _m_tiling(M, TK)
    grid_m = pl.cdiv(M, TM)
    assert w_kn.shape == (K_pad, N), (w_kn.shape, (K_pad, N))

    x2d = obs.reshape(M, K)  # contiguous reshape: a view, no HBM copy

    cost = pl.CostEstimate(
        flops=2 * M * K * N,
        transcendentals=0,
        bytes_accessed=M * K * 4 + K_pad * N * 2 + M * N * 4 + N * 4,
    )

    kernel = functools.partial(_linear_kernel, K=K, TK=TK, num_k=num_k)

    out2d = pl.pallas_call(
        kernel,
        out_shape=jax.ShapeDtypeStruct((M, N), jnp.float32),
        grid_spec=pltpu.PrefetchScalarGridSpec(
            num_scalar_prefetch=0,
            grid=(grid_m, num_k),
            in_specs=[
                pl.BlockSpec((TM, TK), lambda i, k: (i, k)),     # x streams
                pl.BlockSpec((K_pad, N), lambda i, k: (0, 0)),   # weight resident
                pl.BlockSpec((1, N), lambda i, k: (0, 0)),       # bias resident
            ],
            out_specs=pl.BlockSpec((TM, N), lambda i, k: (i, 0)),
        ),
        compiler_params=pltpu.CompilerParams(
            dimension_semantics=("parallel", "arbitrary"),
            vmem_limit_bytes=48 << 20,   # safe on v5e/v6e (128 MiB) and v7x (64 MiB)
        ),
        cost_estimate=cost,
    )(x2d, w_kn, b2d)

    return out2d.reshape(B, T, N)


def init_params(key, input_size):
    """Deterministic nn.Linear(input_size, 128)-shaped params (torch layout)."""
    kw, kb = jax.random.split(key)
    bound = 1.0 / jnp.sqrt(jnp.float32(input_size))
    weight = jax.random.uniform(
        kw, (EMBEDDING_SIZE, input_size), jnp.float32, -bound, bound)
    bias = jax.random.uniform(
        kb, (EMBEDDING_SIZE,), jnp.float32, -bound, bound)
    return weight, bias


# TODO(synk): the dict-observation branch (obs.image indexing) has no tensor
# semantics to translate; only the tensor path is implemented.

if __name__ == "__main__":
    key = jax.random.PRNGKey(0)
    k_obs, k_params = jax.random.split(key)

    # Small shapes: batch=2, seq=8, image obs_space = (4, 4, 3) -> K = 48
    B, T, H, W, C = 2, 8, 4, 4, 3
    input_size = H * W * C

    obs = jax.random.normal(k_obs, (B, T, H, W, C), jnp.float32)
    weight, bias = init_params(k_params, input_size)
    w_kn, b2d = prepare_params(weight, bias)   # one-time, outside forward

    out = image_encoder_forward(obs, w_kn, b2d)
    out = jax.block_until_ready(out)

    # Reference check against plain-JAX linear (same semantics as nn.Linear).
    # bf16 MXU inputs with f32 accumulation -> loosened tolerance vs f32 ref.
    ref = obs.reshape(B, T, -1) @ weight.T + bias
    assert out.shape == (B, T, EMBEDDING_SIZE)
    assert jnp.allclose(out, ref, atol=3e-2, rtol=3e-2)

    print("KERNEL_OK")
</pallas_src>

<mosaic_0001>
module attributes {stable_mosaic.version = 11 : i64} {
  func.func @_linear_kernel(%arg0: i32, %arg1: i32, %arg2: memref<8x48xf32, #tpu.memory_space<vmem>>, %arg3: memref<48x128xbf16, #tpu.memory_space<vmem>>, %arg4: memref<1x128xf32, #tpu.memory_space<vmem>>, %arg5: memref<8x128xf32, #tpu.memory_space<vmem>>) attributes {dimension_semantics = [#tpu.dimension_semantics<parallel>, #tpu.dimension_semantics<arbitrary>], iteration_bounds = array<i64: 2, 1>, scalar_prefetch = 0 : i64, scratch_operands = 0 : i64, tpu.core_type = #tpu.core_type<tc>, window_params = [{transform_indices = @transform_0, window_bounds = array<i64: 8, 48>}, {pipeline_mode = #tpu.pipeline_mode<synchronous>, transform_indices = @transform_1, window_bounds = array<i64: 48, 128>}, {pipeline_mode = #tpu.pipeline_mode<synchronous>, transform_indices = @transform_2, window_bounds = array<i64: 1, 128>}, {transform_indices = @transform_3, window_bounds = array<i64: 8, 128>}]} {
    %c0_i32 = arith.constant 0 : i32
    %0 = arith.cmpi eq, %arg1, %c0_i32 : i32
    %1 = arith.extui %0 : i1 to i32
    %c0_i32_0 = arith.constant 0 : i32
    %2 = arith.cmpi ne, %1, %c0_i32_0 : i32
    scf.if %2 {
      %c0_8 = arith.constant 0 : index
      %c0_9 = arith.constant 0 : index
      %10 = vector.load %arg4[%c0_8, %c0_9] : memref<1x128xf32, #tpu.memory_space<vmem>>, vector<1x128xf32>
      %11 = vector.shape_cast %10 : vector<1x128xf32> to vector<1x128xf32>
      %12 = vector.broadcast %11 : vector<1x128xf32> to vector<8x128xf32>
      %c0_10 = arith.constant 0 : index
      %c0_11 = arith.constant 0 : index
      %13 = vector.load %arg5[%c0_10, %c0_11] : memref<8x128xf32, #tpu.memory_space<vmem>>, vector<8x128xf32>
      tpu.vector_store %arg5[%c0_10, %c0_11], %12 {strides = array<i32>} : memref<8x128xf32, #tpu.memory_space<vmem>>, vector<8x128xf32>,
    } else {
    }
    %c0 = arith.constant 0 : index
    %c0_1 = arith.constant 0 : index
    %3 = vector.load %arg2[%c0, %c0_1] : memref<8x48xf32, #tpu.memory_space<vmem>>, vector<8x48xf32>
    %4 = arith.truncf %3 : vector<8x48xf32> to vector<8x48xbf16>
    %c0_2 = arith.constant 0 : index
    %c0_3 = arith.constant 0 : index
    %5 = vector.load %arg3[%c0_2, %c0_3] : memref<48x128xbf16, #tpu.memory_space<vmem>>, vector<48x128xbf16>
    %c0_4 = arith.constant 0 : index
    %c0_5 = arith.constant 0 : index
    %6 = vector.load %arg5[%c0_4, %c0_5] : memref<8x128xf32, #tpu.memory_space<vmem>>, vector<8x128xf32>
    %cst = arith.constant dense<0.000000e+00> : vector<8x128xf32>
    %7 = tpu.matmul %4, %5, %cst {dimension_numbers = #tpu.dot_dimension_numbers<[1], [0], [0], [1], [0, 0, 1, 1], [], []>} : vector<8x48xbf16>, vector<48x128xbf16>, vector<8x128xf32> -> vector<8x128xf32>
    %8 = arith.addf %6, %7 : vector<8x128xf32>
    %c0_6 = arith.constant 0 : index
    %c0_7 = arith.constant 0 : index
    %9 = vector.load %arg5[%c0_6, %c0_7] : memref<8x128xf32, #tpu.memory_space<vmem>>, vector<8x128xf32>
    tpu.vector_store %arg5[%c0_6, %c0_7], %8 {strides = array<i32>} : memref<8x128xf32, #tpu.memory_space<vmem>>, vector<8x128xf32>,
    return
  }
  func.func @transform_0(%arg0: i32, %arg1: i32) -> (i32, i32) {
    %c0_i32 = arith.constant 0 : i32
    return %arg0, %arg1 : i32, i32
  }
  func.func @transform_1(%arg0: i32, %arg1: i32) -> (i32, i32) {
    %c0_i32 = arith.constant 0 : i32
    %c0_i32_0 = arith.constant 0 : i32
    %c0_i32_1 = arith.constant 0 : i32
    return %c0_i32, %c0_i32_0 : i32, i32
  }
  func.func @transform_2(%arg0: i32, %arg1: i32) -> (i32, i32) {
    %c0_i32 = arith.constant 0 : i32
    %c0_i32_0 = arith.constant 0 : i32
    %c0_i32_1 = arith.constant 0 : i32
    return %c0_i32, %c0_i32_0 : i32, i32
  }
  func.func @transform_3(%arg0: i32, %arg1: i32) -> (i32, i32) {
    %c0_i32 = arith.constant 0 : i32
    %c0_i32_0 = arith.constant 0 : i32
    return %arg0, %c0_i32 : i32, i32
  }
}

</mosaic_0001>

<llo_original>
// kernel: tpu_custom_call.1
$region0: #{tpu_custom_call.1}
  #allocation0 [shape = 'u32[]', space=smem, size = 0x4, offset = 0x4, fixed_abs, tag = 'smem constant byte address 0x4 - core index']
  #allocation1 [shape = 'u32[144,128]{1,0:T(1,128)}', space=vmem, size = 0x12000, scoped, tag = 'internal scratch']
  %s0 = inlined_call_operand.hbm [shape: f32[16,48], index: 0, kind: input, shape index: {}]
  %s1 = inlined_call_operand.hbm [shape: bf16[48,128], index: 1, kind: input, shape index: {}]
  %s2 = inlined_call_operand.vmem [shape: f32[1,128], index: 2, kind: input, shape index: {}]
  %s3 = inlined_call_operand.hbm [shape: f32[16,128], index: 3, kind: output, shape index: {}]
  %s4 = sld [smem:[#allocation0]]
  $region57: #{tpu_custom_call.1} parent=0
    _
  %s6 = ssub.s32 1, %s4
  %s7 = scalar_select 0, %s6, %s4
  $region1: #{tpu_custom_call.1} parent=0
    #allocation2 [shape = 'u8[8192]{0}', space=vmem, size = 0x2000, scoped, tag = 'input window, operand 0']
    #allocation3 [shape = 's32[2]{0}', space=sflag, size = 0x8, scoped, tag = 'scoped memory for tpu_custom_call.1']
    #allocation4 [shape = 's32[2]{0}', space=sflag, size = 0x8, scoped, tag = 'scoped memory for tpu_custom_call.1']
    #allocation5 [shape = 'u8[12288]{0}', space=vmem, size = 0x3000, scoped, tag = 'input window, operand 1, single buffered']
    #allocation6 [shape = 's32[1]{0}', space=sflag, size = 0x4, scoped, tag = 'scoped memory for tpu_custom_call.1']
    #allocation7 [shape = 'u8[8192]{0}', space=vmem, size = 0x2000, scoped, tag = 'output window, operand 0']
    %8 = vsyncpa [#allocation3], 0
    %s9 = scalar_lea.sflag [#allocation3], 1
    %10 = vsyncpa %s9, 0
    %11 = vsyncpa [#allocation6], 0
    %12 = vsyncpa [#allocation4], 0
    %s13 = scalar_lea.sflag [#allocation4], 1
    %14 = vsyncpa %s13, 0
    loop: start=0, step=1, limit=4
    $region2: #{tpu_custom_call.1} parent=1 // loop_pre_header
      _
    $region3: #{tpu_custom_call.1} parent=1 // loop_header
      %s16 = sphi 0, %s20
      %p17 = scmp.ge.s32.totalorder %s16, 4
      %s23 = sphi 0, %s35
      %s24 = sphi 0, %s31
      %s25 = sphi 0, %s23
      %s26 = sphi 0, %s24
      %s27 = sphi 0, %s25
      %s28 = sphi 0, %s26
      %s40 = sphi 0, %s42
      %s43 = sphi 0, %s40
      %s44 = sphi 0, %s43
      %s60 = sphi 0, %s44
      %s64 = sphi 0, %s64
      %s66 = sphi 0, %s64
      %s67 = sphi 0, %s66
      %s81 = sphi 0, %s67
      %s85 = sphi 0, %s85
      %s87 = sphi 0, %s85
      %s88 = sphi 0, %s87
      %s102 = sphi 0, %s88
      %s108 = sphi 0, %s110
      %s111 = sphi 0, %s108
      %s112 = sphi 0, %s111
      %s128 = sphi 0, %s112
    $region4: #{tpu_custom_call.1} parent=1 // loop_header_branch
      %19 = sbr.rel (%p17) target = $region8
    $region5: #{tpu_custom_call.1} parent=1 // loop_body
      %s21 = ssub.s32 %s16, 1
      %s22 = ssub.s32 %s16, 2
      %s29 = sadd.s32 1, %s24
      %p30 = scmp.ge.s32.totalorder %s29, 1
      %s31 = scalar_select %p30, 0, %s29
      %s32 = sadd.s32 1, %s23
      %s33 = scalar_select %p30, %s32, %s23
      %p34 = scmp.ge.s32.totalorder %s33, 2
      %s35 = scalar_select %p34, 0, %s33
      %s36 = ssub.s32 %s23, %s35
      %s37 = ssub.s32 %s24, %s31
      %s38 = sor.u32 %s36, %s37
      %p39 = scmp.eq.s32.totalorder %s38, 0
      %s41 = sadd.s32 %s40, 1
      %s42 = scalar_select %p39, %s40, %s41
      %p45 = pneg %p39
      %p46 = scmp.eq.s32.totalorder %s16, 1
      %p47 = por %p45, %p46
      %p48 = scmp.ne.s32.totalorder %s40, %s43
      %p49 = scmp.eq.s32.totalorder %s16, 0
      %p50 = por %p48, %p49
      %p51 = scmp.ne.s32.totalorder %s40, %s43
      %p52 = scmp.eq.s32.totalorder %s21, 1
      %p53 = por %p51, %p52
      %p54 = scmp.ne.s32.totalorder %s43, %s44
      %p55 = scmp.eq.s32.totalorder %s21, 0
      %p56 = por %p54, %p55
      %p57 = scmp.ne.s32.totalorder %s43, %s44
      %p58 = scmp.eq.s32.totalorder %s22, 1
      %p59 = por %p57, %p58
      %p61 = scmp.ne.s32.totalorder %s44, %s60
      %p62 = scmp.eq.s32.totalorder %s22, 0
      %p63 = por %p61, %p62
      %s65 = sadd.s32 %s64, 1
      %p68 = scmp.eq.s32.totalorder %s16, 1
      %p69 = scmp.ne.s32.totalorder %s64, %s66
      %p70 = scmp.eq.s32.totalorder %s16, 0
      %p71 = por %p69, %p70
      %p72 = scmp.ne.s32.totalorder %s64, %s66
      %p73 = scmp.eq.s32.totalorder %s21, 1
      %p74 = por %p72, %p73
      %p75 = scmp.ne.s32.totalorder %s66, %s67
      %p76 = scmp.eq.s32.totalorder %s21, 0
      %p77 = por %p75, %p76
      %p78 = scmp.ne.s32.totalorder %s66, %s67
      %p79 = scmp.eq.s32.totalorder %s22, 1
      %p80 = por %p78, %p79
      %p82 = scmp.ne.s32.totalorder %s67, %s81
      %p83 = scmp.eq.s32.totalorder %s22, 0
      %p84 = por %p82, %p83
      %s86 = sadd.s32 %s85, 1
      %p89 = scmp.eq.s32.totalorder %s16, 1
      %p90 = scmp.ne.s32.totalorder %s85, %s87
      %p91 = scmp.eq.s32.totalorder %s16, 0
      %p92 = por %p90, %p91
      %p93 = scmp.ne.s32.totalorder %s85, %s87
      %p94 = scmp.eq.s32.totalorder %s21, 1
      %p95 = por %p93, %p94
      %p96 = scmp.ne.s32.totalorder %s87, %s88
      %p97 = scmp.eq.s32.totalorder %s21, 0
      %p98 = por %p96, %p97
      %p99 = scmp.ne.s32.totalorder %s87, %s88
      %p100 = scmp.eq.s32.totalorder %s22, 1
      %p101 = por %p99, %p100
      %p103 = scmp.ne.s32.totalorder %s88, %s102
      %p104 = scmp.eq.s32.totalorder %s22, 0
      %p105 = por %p103, %p104
      %s106 = ssub.s32 %s23, %s35
      %p107 = scmp.eq.s32.totalorder %s106, 0
      %s109 = sadd.s32 %s108, 1
      %s110 = scalar_select %p107, %s108, %s109
      %p113 = pneg %p107
      %p114 = scmp.eq.s32.totalorder %s16, 1
      %p115 = por %p113, %p114
      %p116 = scmp.ne.s32.totalorder %s108, %s111
      %p117 = scmp.eq.s32.totalorder %s16, 0
      %p118 = por %p116, %p117
      %p119 = scmp.ne.s32.totalorder %s108, %s111
      %p120 = scmp.eq.s32.totalorder %s21, 1
      %p121 = por %p119, %p120
      %p122 = scmp.ne.s32.totalorder %s111, %s112
      %p123 = scmp.eq.s32.totalorder %s21, 0
      %p124 = por %p122, %p123
      %p125 = scmp.ne.s32.totalorder %s111, %s112
      %p126 = scmp.eq.s32.totalorder %s22, 1
      %p127 = por %p125, %p126
      %p129 = scmp.ne.s32.totalorder %s112, %s128
      %p130 = scmp.eq.s32.totalorder %s22, 0
      %p131 = por %p129, %p130
      %p132 = scmp.le.s32.totalorder 1, %s16
      %p133 = scmp.lt.s32.totalorder %s16, 3
      %p134 = pnand %p132, %p133
      %p135 = pneg %p134
      // Predicated region
      $region9: #{tpu_custom_call.1} parent=5 // pred_check
        _
      $region10: #{tpu_custom_call.1} parent=5 // pred_check_branch
        %137 = sbr.rel (%p134) target = $region12
      $region11: #{tpu_custom_call.1} parent=5 // pred_region
        %s138 = ssub.s32 %s16, 1
        // Predicated region
        $region13: #{tpu_custom_call.1} parent=11 // pred_check
          %p139 = pneg %p77
        $region14: #{tpu_custom_call.1} parent=11 // pred_check_branch
          %141 = sbr.rel (%p139) target = $region16
        $region15: #{tpu_custom_call.1} parent=11 // pred_region
          %s143 = ssub.s32 384, 384
          %144 = vsyncadd [#allocation6], %s143
          %s145 = sshll.u32 [#allocation5], 4
          %s146 = int_to_ptr.vmem [resolvable:$true] %s145
          %151 = dma.hbm_to_vmem [thread:$0]  %s1, 384, %s146, [#allocation6], 64, 64, 4
        $region16: #{tpu_custom_call.1} parent=11 // pred_fallthru
          _
        // Predicated region
        $region17: #{tpu_custom_call.1} parent=11 // pred_check
          %p152 = pneg %p98
        $region18: #{tpu_custom_call.1} parent=11 // pred_check_branch
          %154 = sbr.rel (%p152) target = $region20
        $region19: #{tpu_custom_call.1} parent=11 // pred_region
          _
        $region20: #{tpu_custom_call.1} parent=11 // pred_fallthru
          _
      $region12: #{tpu_custom_call.1} parent=5 // pred_fallthru
        _
      %p155 = scmp.lt.s32.totalorder %s16, 2
      // Predicated region
      $region21: #{tpu_custom_call.1} parent=5 // pred_check
        %p156 = pneg %p155
      $region22: #{tpu_custom_call.1} parent=5 // pred_check_branch
        %158 = sbr.rel (%p156) target = $region24
      $region23: #{tpu_custom_call.1} parent=5 // pred_region
        // Predicated region
        $region25: #{tpu_custom_call.1} parent=23 // pred_check
          %p159 = pneg %p50
        $region26: #{tpu_custom_call.1} parent=23 // pred_check_branch
          %161 = sbr.rel (%p159) target = $region28
        $region27: #{tpu_custom_call.1} parent=23 // pred_region
          %s162 = sand.u32 %s40, 1
          %s163 = scalar_lea.sflag [#allocation3], %s162
          %s164 = sand.u32 %s40, 1
          %s165 = smul.addr %s164, 8
          %s166 = scalar_lea.vmem [#allocation2], %s165
          %s168 = ssub.s32 128, 128
          %169 = vsyncadd %s163, %s168
          %s170 = sadd.s32 %s24, %s23
          %s171 = smul.addr %s170, 128
          %s172 = scalar_lea.hbm %s0, %s171
          %s174 = sshll.u32 %s166, 4
          %s175 = int_to_ptr.vmem [resolvable:$true] %s174
          %177 = dma.hbm_to_vmem [thread:$0]  %s172, 128, %s175, %s163
        $region28: #{tpu_custom_call.1} parent=23 // pred_fallthru
          _
      $region24: #{tpu_custom_call.1} parent=5 // pred_fallthru
        _
      %p178 = scmp.le.s32.totalorder 1, %s16
      %p179 = scmp.lt.s32.totalorder %s16, 3
      %p180 = pnand %p178, %p179
      %p181 = pneg %p180
      // Predicated region
      $region29: #{tpu_custom_call.1} parent=5 // pred_check
        _
      $region30: #{tpu_custom_call.1} parent=5 // pred_check_branch
        %183 = sbr.rel (%p180) target = $region32
      $region31: #{tpu_custom_call.1} parent=5 // pred_region
        %s184 = ssub.s32 %s16, 1
        %s185 = sand.u32 %s43, 1
        %s186 = scalar_lea.sflag [#allocation3], %s185
        %s187 = sand.u32 %s43, 1
        %s188 = smul.addr %s187, 8
        %s189 = scalar_lea.vmem [#allocation2], %s188
        // Predicated region
        $region33: #{tpu_custom_call.1} parent=31 // pred_check
          %p190 = pneg %p56
        $region34: #{tpu_custom_call.1} parent=31 // pred_check_branch
          %192 = sbr.rel (%p190) target = $region36
        $region35: #{tpu_custom_call.1} parent=31 // pred_region
          %193 = dma.done %s186, 128
        $region36: #{tpu_custom_call.1} parent=31 // pred_fallthru
          _
        // Predicated region
        $region37: #{tpu_custom_call.1} parent=31 // pred_check
          %p194 = pneg %p77
        $region38: #{tpu_custom_call.1} parent=31 // pred_check_branch
          %196 = sbr.rel (%p194) target = $region40
        $region39: #{tpu_custom_call.1} parent=31 // pred_region
          %197 = dma.done [#allocation6], 384
        $region40: #{tpu_custom_call.1} parent=31 // pred_fallthru
          _
        %s198 = sand.u32 %s43, 1
        %s199 = scalar_lea.sflag [#allocation3], %s198
        %s200 = sand.u32 %s43, 1
        %s201 = smul.addr %s200, 8
        %s202 = scalar_lea.vmem [#allocation2], %s201
        %p203 = pneg %p56
        %p204 = pneg %p53
        %p205 = pneg %p77
        %p206 = pneg %p74
        %p207 = pneg %p98
        %p208 = pneg %p95
        %p209 = pneg %p124
        %p210 = pneg %p121
        %s211 = sand.u32 %s111, 1
        %s212 = scalar_lea.sflag [#allocation4], %s211
        %s213 = sand.u32 %s111, 1
        %s214 = smul.addr %s213, 8
        %s215 = scalar_lea.vmem [#allocation7], %s214
        %p217 = scmp.eq.s32.totalorder %s26, 0
        // Predicated region
        $region41: #{tpu_custom_call.1} parent=31 // pred_check
          %p218 = pneg %p217
        $region42: #{tpu_custom_call.1} parent=31 // pred_check_branch
          %220 = sbr.rel (%p218) target = $region44
        $region43: #{tpu_custom_call.1} parent=31 // pred_region
          %v221 = vld [vmem:[%s2] sm:$0x1]
          %v223 = vlaneseq
          %v224 = vshrl.u32 %v223, 7
          %v225 = vsub.s32 0, %v224
          %v226 = vrot.slane %v221, %v225
          %228 = vst [vmem:[%s215] sm:$0xff] %v226
        $region44: #{tpu_custom_call.1} parent=31 // pred_fallthru
          _
        %v229 = vld [vmem:[%s189] sm:$0xff]
        %v230 = vpack.c.bf16 %v229, %v229
        %v231 = vld [vmem:[#allocation5] sm:$0xf]
        %v232 = vld [vmem:[#allocation5 + $0x4] sm:$0xf]
        %v233 = vld [vmem:[#allocation5 + $0x8] sm:$0xf]
        %v234 = vld [vmem:[#allocation5 + $0xc] sm:$0xf]
        %v235 = vld [vmem:[#allocation5 + $0x10] sm:$0xf]
        %v236 = vld [vmem:[#allocation5 + $0x14] sm:$0xf]
        %v237 = vld [vmem:[%s215] sm:$0xff]
        %v244 = vunpack.c.l.b16 %v231
        %v245 = vunpack.c.l.b16 %v232
        %v246 = vunpack.c.l.b16 %v233
        %v247 = vunpack.c.l.b16 %v234
        %v248 = vunpack.c.l.b16 %v235
        %v249 = vunpack.c.l.b16 %v236
        %v250 = vpack.c.b16 %v245, %v244
        %v251 = vpack.c.b16 %v247, %v246
        %v252 = vpack.c.b16 %v249, %v248
        %vm256 = vcmask 392192
        %v258 = vsel %vm256, %v230, 0
        %260 = vmatprep.subr.bf16.mxu0 0
        %261 = vmatpush1.bf16.msra.mxu0 0
        %262 = vmatprep.subr.bf16.mxu0 0
        %263 = vmatpush1.bf16.msra.mxu0 0
        %264 = vmatprep.subr.bf16.mxu0 0
        %265 = vmatpush1.bf16.msra.mxu0 0
        %266 = vmatprep.subr.bf16.mxu0 0
        %267 = vmatpush1.bf16.msra.mxu0 0
        %268 = vmatprep.subr.bf16.mxu0 0
        %269 = vmatpush1.bf16.msra.mxu0 0
        %270 = vmatprep.subr.bf16.mxu0 0
        %271 = vmatpush1.bf16.msra.mxu0 %v252
        %272 = vmatprep.subr.bf16.mxu0 0
        %273 = vmatpush1.bf16.msra.mxu0 %v251
        %274 = vmatprep.subr.bf16.mxu0 0
        %275 = vmatpush1.bf16.msra.mxu0 %v250
        %276 = vmatprep.subr.bf16.mxu0 0
        %277 = vmatpush2.bf16.msra.mxu0 0
        %278 = vmatprep.subr.bf16.mxu0 0
        %279 = vmatpush2.bf16.msra.mxu0 0
        %280 = vmatprep.subr.bf16.mxu0 0
        %281 = vmatpush2.bf16.msra.mxu0 0
        %282 = vmatprep.subr.bf16.mxu0 0
        %283 = vmatpush2.bf16.msra.mxu0 0
        %284 = vmatprep.subr.bf16.mxu0 0
        %285 = vmatpush2.bf16.msra.mxu0 0
        %286 = vmatprep.subr.bf16.mxu0 0
        %287 = vmatpush2.bf16.msra.mxu0 0
        %288 = vmatprep.subr.bf16.mxu0 0
        %289 = vmatpush2.bf16.msra.mxu0 0
        %290 = vmatprep.subr.bf16.mxu0 0
        %291 = vmatpush2.bf16.msra.mxu0 0
        %292 = vmatprep.mubr.bf16.mxu0 0
        %293 = vmatmul.mubr.bf16.gmra.mxu0 %v258
        %v294 = vpop.f32.mrf.mxu0
        %v295 = vadd.f32 0.0, %v294
        %v296 = vpop.f32.mrf.mxu0
        %v297 = vpop.f32.mrf.mxu0
        %v298 = vpop.f32.mrf.mxu0
        %299 = vdwg.mxu0
        %v300 = vadd.f32 %v237, %v295
        %301 = vst [vmem:[%s215] sm:$0xff] %v300
        %s302 = sand.u32 %s111, 1
        %s303 = scalar_lea.sflag [#allocation4], %s302
        %s304 = sand.u32 %s111, 1
        %s305 = smul.addr %s304, 8
        %s306 = scalar_lea.vmem [#allocation7], %s305
        // Predicated region
        $region45: #{tpu_custom_call.1} parent=31 // pred_check
          %p307 = pneg %p121
        $region46: #{tpu_custom_call.1} parent=31 // pred_check_branch
          %309 = sbr.rel (%p307) target = $region48
        $region47: #{tpu_custom_call.1} parent=31 // pred_region
          %s311 = ssub.s32 128, 128
          %312 = vsyncadd %s303, %s311
          %s313 = smul.addr %s25, 128
          %s314 = scalar_lea.hbm %s3, %s313
          %s316 = sshll.u32 %s306, 4
          %s317 = int_to_ptr.vmem [resolvable:$true] %s316
          %319 = dma.vmem_to_hbm [thread:$0]  %s317, 128, %s314, %s303
        $region48: #{tpu_custom_call.1} parent=31 // pred_fallthru
          _
      $region32: #{tpu_custom_call.1} parent=5 // pred_fallthru
        _
      %p320 = scmp.le.s32.totalorder 2, %s16
      // Predicated region
      $region49: #{tpu_custom_call.1} parent=5 // pred_check
        %p321 = pneg %p320
      $region50: #{tpu_custom_call.1} parent=5 // pred_check_branch
        %323 = sbr.rel (%p321) target = $region52
      $region51: #{tpu_custom_call.1} parent=5 // pred_region
        %s324 = ssub.s32 %s16, 2
        // Predicated region
        $region53: #{tpu_custom_call.1} parent=51 // pred_check
          %p325 = pneg %p127
        $region54: #{tpu_custom_call.1} parent=51 // pred_check_branch
          %327 = sbr.rel (%p325) target = $region56
        $region55: #{tpu_custom_call.1} parent=51 // pred_region
          %s328 = sand.u32 %s112, 1
          %s329 = scalar_lea.sflag [#allocation4], %s328
          %s330 = sand.u32 %s112, 1
          %s331 = smul.addr %s330, 8
          %s332 = scalar_lea.vmem [#allocation7], %s331
          %333 = dma.done %s329, 128
        $region56: #{tpu_custom_call.1} parent=51 // pred_fallthru
          _
      $region52: #{tpu_custom_call.1} parent=5 // pred_fallthru
        _
    $region6: #{tpu_custom_call.1} parent=1 // loop_footer
      %s20 = sadd.s32 1, %s16
    $region7: #{tpu_custom_call.1} parent=1 // loop_footer_branch
      %15 = sbr.rel target = $region3
    $region8: #{tpu_custom_call.1} parent=1 // loop_exit
      _
    %334 = vsyncpa [#allocation3], 1
    %s335 = scalar_lea.sflag [#allocation3], 1
    %336 = vsyncpa %s335, 1
    %337 = vsyncpa [#allocation6], 1
    %338 = vsyncpa [#allocation4], 1
    %s339 = scalar_lea.sflag [#allocation4], 1
    %340 = vsyncpa %s339, 1

</llo_original>
